<compile_context>
chip_gen: v7x
topology: tpu7x:2x2x1
jax: 0.10.0
libtpu: 0.0.40
codegen_flags: <defaults>
</compile_context>

<pallas_src>
import functools

import jax
import jax.numpy as jnp
from jax.experimental import pallas as pl
from jax.experimental.pallas import tpu as pltpu

FEAT = 128      # lane width for hidden layers (3, 9, 18, 9 all fit in one vreg row)
SUB = 8         # sublane alignment
HIDDENS = (3, 9, 18, 9, 1)


def _round_up(x, m):
    return ((x + m - 1) // m) * m


def _mlp_kernel(x_ref,
                w1_ref, b1_ref,
                w2_ref, b2_ref,
                w3_ref, b3_ref,
                w4_ref, b4_ref,
                w5_ref, b5_ref,
                o_ref):
    """One batch tile of the 5-layer MLP. Layers 1-4 on the MXU, layer 5 on VPU+XLU."""
    h = x_ref[...]                                              # (TB, s_pad)
    h = jnp.maximum(
        jnp.dot(h, w1_ref[...], preferred_element_type=jnp.float32) + b1_ref[...], 0.0)
    h = jnp.maximum(
        jnp.dot(h, w2_ref[...], preferred_element_type=jnp.float32) + b2_ref[...], 0.0)
    h = jnp.maximum(
        jnp.dot(h, w3_ref[...], preferred_element_type=jnp.float32) + b3_ref[...], 0.0)
    h = jnp.maximum(
        jnp.dot(h, w4_ref[...], preferred_element_type=jnp.float32) + b4_ref[...], 0.0)
    # Layer 5 (9 -> 1): only one output lane carries data, so do a VPU multiply with
    # the (1, 128) weight row and reduce across lanes instead of an MXU matmul.
    out = jnp.sum(h * w5_ref[...], axis=-1, keepdims=True) + b5_ref[...]
    o_ref[...] = out.astype(o_ref.dtype)


def init_params(key, state_size, dtype=jnp.float32):
    """Deterministic synthetic params (nn.Linear-style init). W stored as (in, out)."""
    dims = (state_size,) + HIDDENS
    params = []
    for li in range(len(HIDDENS)):
        kw, kb, key = jax.random.split(key, 3)
        fan_in, fan_out = dims[li], dims[li + 1]
        bound = 1.0 / jnp.sqrt(jnp.asarray(fan_in, dtype))
        w = jax.random.uniform(kw, (fan_in, fan_out), dtype, -bound, bound)
        b = jax.random.uniform(kb, (fan_out,), dtype, -bound, bound)
        params.append((w, b))
    return params


def prepare_params(params):
    """Zero-pad parameters ONCE (outside the per-call jitted path).

    Layers 1-4: W -> (K_pad, 128), b -> (1, 128). Layer 5: W -> (1, 128) row vector,
    b -> (1, 1). Zero padding is exact under ReLU (0-weight columns + 0 bias stay 0).
    """
    (w1, b1), (w2, b2), (w3, b3), (w4, b4), (w5, b5) = params

    def pad_wb(w, b, rows):
        w = jnp.asarray(w, jnp.float32)
        b = jnp.asarray(b, jnp.float32)
        wp = jnp.zeros((rows, FEAT), jnp.float32).at[: w.shape[0], : w.shape[1]].set(w)
        bp = jnp.zeros((1, FEAT), jnp.float32).at[0, : b.shape[0]].set(b)
        return wp, bp

    s_pad = _round_up(w1.shape[0], SUB)
    w1p, b1p = pad_wb(w1, b1, s_pad)
    w2p, b2p = pad_wb(w2, b2, FEAT)
    w3p, b3p = pad_wb(w3, b3, FEAT)
    w4p, b4p = pad_wb(w4, b4, FEAT)
    w5p = jnp.zeros((1, FEAT), jnp.float32).at[0, : w5.shape[0]].set(
        jnp.asarray(w5, jnp.float32)[:, 0])
    b5p = jnp.asarray(b5, jnp.float32).reshape(1, 1)
    return (w1p, b1p, w2p, b2p, w3p, b3p, w4p, b4p, w5p, b5p)


@functools.partial(jax.jit, static_argnames=("tile_batch",))
def feed_forward_nn(state, padded_params, *, tile_batch=1024):
    """Forward pass matching FeedForwardNN.forward. state: (batch, state_size)."""
    batch, state_size = state.shape
    s_pad = padded_params[0].shape[0]            # W1 rows = state_size rounded to 8

    # Batch tile: multiple of 8 sublanes, capped at tile_batch, batch padded to a
    # whole number of tiles (cheap: at most TB-1 extra rows of ~s_pad*4 bytes each).
    tb = _round_up(min(tile_batch, _round_up(batch, SUB)), SUB)
    b_pad = _round_up(batch, tb)
    grid = (b_pad // tb,)

    x = jnp.zeros((b_pad, s_pad), jnp.float32)
    x = x.at[:batch, :state_size].set(state.astype(jnp.float32))

    in_specs = [pl.BlockSpec((tb, s_pad), lambda i: (i, 0))]      # tiled over batch
    for p in padded_params:                                       # VMEM-resident
        in_specs.append(pl.BlockSpec(p.shape, lambda i: (0, 0)))

    out = pl.pallas_call(
        _mlp_kernel,
        out_shape=jax.ShapeDtypeStruct((b_pad, 1), jnp.float32),
        grid=grid,
        in_specs=in_specs,
        out_specs=pl.BlockSpec((tb, 1), lambda i: (i, 0)),
        compiler_params=pltpu.CompilerParams(
            dimension_semantics=("parallel",)),
    )(x, *padded_params)

    return out[:batch]


def _reference(state, params):
    h = state.astype(jnp.float32)
    for i, (w, b) in enumerate(params):
        h = h @ w + b
        if i < len(params) - 1:
            h = jnp.maximum(h, 0.0)
    return h


if __name__ == "__main__":
    key = jax.random.PRNGKey(0)
    k_params, k_state1, k_state2 = jax.random.split(key, 3)

    state_size = 16
    params = init_params(k_params, state_size)
    padded = prepare_params(params)               # padded once, outside the jit path

    # Small case from the spec: batch=2.
    state = jax.random.normal(k_state1, (2, state_size), jnp.float32)
    out = jax.block_until_ready(feed_forward_nn(state, padded))
    ref = _reference(state, params)
    assert out.shape == (2, 1), out.shape
    assert jnp.allclose(out, ref, atol=1e-5, rtol=1e-5), (out, ref)

    # Multi-tile case to exercise the batch grid (batch=50, TB=16 -> grid=(4,)).
    state2 = jax.random.normal(k_state2, (50, state_size), jnp.float32)
    out2 = jax.block_until_ready(feed_forward_nn(state2, padded, tile_batch=16))
    ref2 = _reference(state2, params)
    assert out2.shape == (50, 1), out2.shape
    assert jnp.allclose(out2, ref2, atol=1e-5, rtol=1e-5)

    print("KERNEL_OK")
</pallas_src>

<mosaic_0001>
module attributes {stable_mosaic.version = 11 : i64} {
  func.func @_mlp_kernel(%arg0: i32, %arg1: memref<8x16xf32, #tpu.memory_space<vmem>>, %arg2: memref<16x128xf32, #tpu.memory_space<vmem>>, %arg3: memref<1x128xf32, #tpu.memory_space<vmem>>, %arg4: memref<128x128xf32, #tpu.memory_space<vmem>>, %arg5: memref<1x128xf32, #tpu.memory_space<vmem>>, %arg6: memref<128x128xf32, #tpu.memory_space<vmem>>, %arg7: memref<1x128xf32, #tpu.memory_space<vmem>>, %arg8: memref<128x128xf32, #tpu.memory_space<vmem>>, %arg9: memref<1x128xf32, #tpu.memory_space<vmem>>, %arg10: memref<1x128xf32, #tpu.memory_space<vmem>>, %arg11: memref<1x1xf32, #tpu.memory_space<vmem>>, %arg12: memref<8x1xf32, #tpu.memory_space<vmem>>) attributes {dimension_semantics = [#tpu.dimension_semantics<parallel>], iteration_bounds = array<i64: 1>, scalar_prefetch = 0 : i64, scratch_operands = 0 : i64, tpu.core_type = #tpu.core_type<tc>, window_params = [{transform_indices = @transform_0, window_bounds = array<i64: 8, 16>}, {pipeline_mode = #tpu.pipeline_mode<synchronous>, transform_indices = @transform_1, window_bounds = array<i64: 16, 128>}, {pipeline_mode = #tpu.pipeline_mode<synchronous>, transform_indices = @transform_2, window_bounds = array<i64: 1, 128>}, {pipeline_mode = #tpu.pipeline_mode<synchronous>, transform_indices = @transform_3, window_bounds = array<i64: 128, 128>}, {pipeline_mode = #tpu.pipeline_mode<synchronous>, transform_indices = @transform_4, window_bounds = array<i64: 1, 128>}, {pipeline_mode = #tpu.pipeline_mode<synchronous>, transform_indices = @transform_5, window_bounds = array<i64: 128, 128>}, {pipeline_mode = #tpu.pipeline_mode<synchronous>, transform_indices = @transform_6, window_bounds = array<i64: 1, 128>}, {pipeline_mode = #tpu.pipeline_mode<synchronous>, transform_indices = @transform_7, window_bounds = array<i64: 128, 128>}, {pipeline_mode = #tpu.pipeline_mode<synchronous>, transform_indices = @transform_8, window_bounds = array<i64: 1, 128>}, {pipeline_mode = #tpu.pipeline_mode<synchronous>, transform_indices = @transform_9, window_bounds = array<i64: 1, 128>}, {pipeline_mode = #tpu.pipeline_mode<synchronous>, transform_indices = @transform_10, window_bounds = array<i64: 1, 1>}, {transform_indices = @transform_11, window_bounds = array<i64: 8, 1>}]} {
    %c0 = arith.constant 0 : index
    %c0_0 = arith.constant 0 : index
    %0 = vector.load %arg1[%c0, %c0_0] : memref<8x16xf32, #tpu.memory_space<vmem>>, vector<8x16xf32>
    %c0_1 = arith.constant 0 : index
    %c0_2 = arith.constant 0 : index
    %1 = vector.load %arg2[%c0_1, %c0_2] : memref<16x128xf32, #tpu.memory_space<vmem>>, vector<16x128xf32>
    %cst = arith.constant dense<0.000000e+00> : vector<8x128xf32>
    %2 = tpu.matmul %0, %1, %cst {dimension_numbers = #tpu.dot_dimension_numbers<[1], [0], [0], [1], [0, 0, 1, 1], [], []>} : vector<8x16xf32>, vector<16x128xf32>, vector<8x128xf32> -> vector<8x128xf32>
    %c0_3 = arith.constant 0 : index
    %c0_4 = arith.constant 0 : index
    %3 = vector.load %arg3[%c0_3, %c0_4] : memref<1x128xf32, #tpu.memory_space<vmem>>, vector<1x128xf32>
    %4 = vector.broadcast %3 : vector<1x128xf32> to vector<8x128xf32>
    %5 = arith.addf %2, %4 : vector<8x128xf32>
    %cst_5 = arith.constant 0.000000e+00 : f32
    %6 = vector.broadcast %cst_5 : f32 to vector<8x128xf32>
    %7 = arith.maximumf %5, %6 : vector<8x128xf32>
    %c0_6 = arith.constant 0 : index
    %c0_7 = arith.constant 0 : index
    %8 = vector.load %arg4[%c0_6, %c0_7] : memref<128x128xf32, #tpu.memory_space<vmem>>, vector<128x128xf32>
    %cst_8 = arith.constant dense<0.000000e+00> : vector<8x128xf32>
    %9 = tpu.matmul %7, %8, %cst_8 {dimension_numbers = #tpu.dot_dimension_numbers<[1], [0], [0], [1], [0, 0, 1, 1], [], []>} : vector<8x128xf32>, vector<128x128xf32>, vector<8x128xf32> -> vector<8x128xf32>
    %c0_9 = arith.constant 0 : index
    %c0_10 = arith.constant 0 : index
    %10 = vector.load %arg5[%c0_9, %c0_10] : memref<1x128xf32, #tpu.memory_space<vmem>>, vector<1x128xf32>
    %11 = vector.broadcast %10 : vector<1x128xf32> to vector<8x128xf32>
    %12 = arith.addf %9, %11 : vector<8x128xf32>
    %cst_11 = arith.constant 0.000000e+00 : f32
    %13 = vector.broadcast %cst_11 : f32 to vector<8x128xf32>
    %14 = arith.maximumf %12, %13 : vector<8x128xf32>
    %c0_12 = arith.constant 0 : index
    %c0_13 = arith.constant 0 : index
    %15 = vector.load %arg6[%c0_12, %c0_13] : memref<128x128xf32, #tpu.memory_space<vmem>>, vector<128x128xf32>
    %cst_14 = arith.constant dense<0.000000e+00> : vector<8x128xf32>
    %16 = tpu.matmul %14, %15, %cst_14 {dimension_numbers = #tpu.dot_dimension_numbers<[1], [0], [0], [1], [0, 0, 1, 1], [], []>} : vector<8x128xf32>, vector<128x128xf32>, vector<8x128xf32> -> vector<8x128xf32>
    %c0_15 = arith.constant 0 : index
    %c0_16 = arith.constant 0 : index
    %17 = vector.load %arg7[%c0_15, %c0_16] : memref<1x128xf32, #tpu.memory_space<vmem>>, vector<1x128xf32>
    %18 = vector.broadcast %17 : vector<1x128xf32> to vector<8x128xf32>
    %19 = arith.addf %16, %18 : vector<8x128xf32>
    %cst_17 = arith.constant 0.000000e+00 : f32
    %20 = vector.broadcast %cst_17 : f32 to vector<8x128xf32>
    %21 = arith.maximumf %19, %20 : vector<8x128xf32>
    %c0_18 = arith.constant 0 : index
    %c0_19 = arith.constant 0 : index
    %22 = vector.load %arg8[%c0_18, %c0_19] : memref<128x128xf32, #tpu.memory_space<vmem>>, vector<128x128xf32>
    %cst_20 = arith.constant dense<0.000000e+00> : vector<8x128xf32>
    %23 = tpu.matmul %21, %22, %cst_20 {dimension_numbers = #tpu.dot_dimension_numbers<[1], [0], [0], [1], [0, 0, 1, 1], [], []>} : vector<8x128xf32>, vector<128x128xf32>, vector<8x128xf32> -> vector<8x128xf32>
    %c0_21 = arith.constant 0 : index
    %c0_22 = arith.constant 0 : index
    %24 = vector.load %arg9[%c0_21, %c0_22] : memref<1x128xf32, #tpu.memory_space<vmem>>, vector<1x128xf32>
    %25 = vector.broadcast %24 : vector<1x128xf32> to vector<8x128xf32>
    %26 = arith.addf %23, %25 : vector<8x128xf32>
    %cst_23 = arith.constant 0.000000e+00 : f32
    %27 = vector.broadcast %cst_23 : f32 to vector<8x128xf32>
    %28 = arith.maximumf %26, %27 : vector<8x128xf32>
    %c0_24 = arith.constant 0 : index
    %c0_25 = arith.constant 0 : index
    %29 = vector.load %arg10[%c0_24, %c0_25] : memref<1x128xf32, #tpu.memory_space<vmem>>, vector<1x128xf32>
    %30 = vector.broadcast %29 : vector<1x128xf32> to vector<8x128xf32>
    %31 = arith.mulf %28, %30 : vector<8x128xf32>
    %cst_26 = arith.constant dense<0.000000e+00> : vector<8xf32>
    %32 = vector.multi_reduction <add>, %31, %cst_26 [1] : vector<8x128xf32> to vector<8xf32>
    %33 = vector.shape_cast %32 : vector<8xf32> to vector<8x1xf32>
    %c0_27 = arith.constant 0 : index
    %c0_28 = arith.constant 0 : index
    %34 = vector.load %arg11[%c0_27, %c0_28] : memref<1x1xf32, #tpu.memory_space<vmem>>, vector<1x1xf32>
    %35 = vector.broadcast %34 : vector<1x1xf32> to vector<8x1xf32>
    %36 = arith.addf %33, %35 : vector<8x1xf32>
    %c0_29 = arith.constant 0 : index
    %c0_30 = arith.constant 0 : index
    %37 = vector.load %arg12[%c0_29, %c0_30] : memref<8x1xf32, #tpu.memory_space<vmem>>, vector<8x1xf32>
    tpu.vector_store %arg12[%c0_29, %c0_30], %36 {strides = array<i32>} : memref<8x1xf32, #tpu.memory_space<vmem>>, vector<8x1xf32>,
    return
  }
  func.func @transform_0(%arg0: i32) -> (i32, i32) {
    %c0_i32 = arith.constant 0 : i32
    %c0_i32_0 = arith.constant 0 : i32
    return %arg0, %c0_i32 : i32, i32
  }
  func.func @transform_1(%arg0: i32) -> (i32, i32) {
    %c0_i32 = arith.constant 0 : i32
    %c0_i32_0 = arith.constant 0 : i32
    %c0_i32_1 = arith.constant 0 : i32
    return %c0_i32, %c0_i32_0 : i32, i32
  }
  func.func @transform_2(%arg0: i32) -> (i32, i32) {
    %c0_i32 = arith.constant 0 : i32
    %c0_i32_0 = arith.constant 0 : i32
    %c0_i32_1 = arith.constant 0 : i32
    return %c0_i32, %c0_i32_0 : i32, i32
  }
  func.func @transform_3(%arg0: i32) -> (i32, i32) {
    %c0_i32 = arith.constant 0 : i32
    %c0_i32_0 = arith.constant 0 : i32
    %c0_i32_1 = arith.constant 0 : i32
    return %c0_i32, %c0_i32_0 : i32, i32
  }
  func.func @transform_4(%arg0: i32) -> (i32, i32) {
    %c0_i32 = arith.constant 0 : i32
    %c0_i32_0 = arith.constant 0 : i32
    %c0_i32_1 = arith.constant 0 : i32
    return %c0_i32, %c0_i32_0 : i32, i32
  }
  func.func @transform_5(%arg0: i32) -> (i32, i32) {
    %c0_i32 = arith.constant 0 : i32
    %c0_i32_0 = arith.constant 0 : i32
    %c0_i32_1 = arith.constant 0 : i32
    return %c0_i32, %c0_i32_0 : i32, i32
  }
  func.func @transform_6(%arg0: i32) -> (i32, i32) {
    %c0_i32 = arith.constant 0 : i32
    %c0_i32_0 = arith.constant 0 : i32
    %c0_i32_1 = arith.constant 0 : i32
    return %c0_i32, %c0_i32_0 : i32, i32
  }
  func.func @transform_7(%arg0: i32) -> (i32, i32) {
    %c0_i32 = arith.constant 0 : i32
    %c0_i32_0 = arith.constant 0 : i32
    %c0_i32_1 = arith.constant 0 : i32
    return %c0_i32, %c0_i32_0 : i32, i32
  }
  func.func @transform_8(%arg0: i32) -> (i32, i32) {
    %c0_i32 = arith.constant 0 : i32
    %c0_i32_0 = arith.constant 0 : i32
    %c0_i32_1 = arith.constant 0 : i32
    return %c0_i32, %c0_i32_0 : i32, i32
  }
  func.func @transform_9(%arg0: i32) -> (i32, i32) {
    %c0_i32 = arith.constant 0 : i32
    %c0_i32_0 = arith.constant 0 : i32
    %c0_i32_1 = arith.constant 0 : i32
    return %c0_i32, %c0_i32_0 : i32, i32
  }
  func.func @transform_10(%arg0: i32) -> (i32, i32) {
    %c0_i32 = arith.constant 0 : i32
    %c0_i32_0 = arith.constant 0 : i32
    %c0_i32_1 = arith.constant 0 : i32
    return %c0_i32, %c0_i32_0 : i32, i32
  }
  func.func @transform_11(%arg0: i32) -> (i32, i32) {
    %c0_i32 = arith.constant 0 : i32
    %c0_i32_0 = arith.constant 0 : i32
    return %arg0, %c0_i32 : i32, i32
  }
}

</mosaic_0001>

<llo_original>
// kernel: feed_forward_nn.1
$region0: #{feed_forward_nn.1}
  #allocation0 [shape = 'u32[]', space=smem, size = 0x4, offset = 0x4, fixed_abs, tag = 'smem constant byte address 0x4 - core index']
  #allocation1 [shape = 'u32[144,128]{1,0:T(1,128)}', space=vmem, size = 0x12000, scoped, tag = 'internal scratch']
  #allocation2 [shape = 'f32[1,1]{1,0:T(1,128)S(1)}', space=vmem, size = 0x200, scoped, tag = 'scoped memory for feed_forward_nn.1']
  %s0 = inlined_call_operand.vmem [shape: f32[8,16], index: 0, kind: input, shape index: {}]
  %s1 = inlined_call_operand.vmem [shape: f32[16,128], index: 1, kind: input, shape index: {}]
  %s2 = inlined_call_operand.vmem [shape: f32[1,128], index: 2, kind: input, shape index: {}]
  %s3 = inlined_call_operand.hbm [shape: f32[128,128], index: 3, kind: input, shape index: {}]
  %s4 = inlined_call_operand.vmem [shape: f32[1,128], index: 4, kind: input, shape index: {}]
  %s5 = inlined_call_operand.hbm [shape: f32[128,128], index: 5, kind: input, shape index: {}]
  %s6 = inlined_call_operand.vmem [shape: f32[1,128], index: 6, kind: input, shape index: {}]
  %s7 = inlined_call_operand.hbm [shape: f32[128,128], index: 7, kind: input, shape index: {}]
  %s8 = inlined_call_operand.vmem [shape: f32[1,128], index: 8, kind: input, shape index: {}]
  %s9 = inlined_call_operand.vmem [shape: f32[1,128], index: 9, kind: input, shape index: {}]
  %s10 = inlined_call_operand.<no memory space> [shape: f32[1,1], index: 10, kind: input, shape index: {}]
  %s11 = inlined_call_operand.vmem [shape: f32[8,1], index: 11, kind: output, shape index: {}]
  %s12 = sld [smem:[#allocation0]]
  $region66: #{feed_forward_nn.1} parent=0
    _
  %s14 = ssub.s32 1, %s12
  %s15 = scalar_select 0, %s14, %s12
  %v16 = vstv %s10
  %17 = vst [vmem:[#allocation2] sm:$0x1] %v16
  $region1: #{feed_forward_nn.1} parent=0
    #allocation3 [shape = 'u8[65536]{0}', space=vmem, size = 0x10000, scoped, tag = 'input window, operand 3, single buffered']
    #allocation4 [shape = 's32[1]{0}', space=sflag, size = 0x4, scoped, tag = 'scoped memory for feed_forward_nn.1']
    #allocation5 [shape = 'u8[65536]{0}', space=vmem, size = 0x10000, scoped, tag = 'input window, operand 5, single buffered']
    #allocation6 [shape = 's32[1]{0}', space=sflag, size = 0x4, scoped, tag = 'scoped memory for feed_forward_nn.1']
    #allocation7 [shape = 'u8[65536]{0}', space=vmem, size = 0x10000, scoped, tag = 'input window, operand 7, single buffered']
    %18 = vsyncpa [#allocation4], 0
    %19 = vsyncpa [#allocation6], 0
    // Predicated region
    $region2: #{feed_forward_nn.1} parent=1 // pred_check
      _
    $region3: #{feed_forward_nn.1} parent=1 // pred_check_branch
      %21 = sbr.rel (0) target = $region5
    $region4: #{feed_forward_nn.1} parent=1 // pred_region
      _
    $region5: #{feed_forward_nn.1} parent=1 // pred_fallthru
      _
    // Predicated region
    $region6: #{feed_forward_nn.1} parent=1 // pred_check
      _
    $region7: #{feed_forward_nn.1} parent=1 // pred_check_branch
      %23 = sbr.rel (0) target = $region9
    $region8: #{feed_forward_nn.1} parent=1 // pred_region
      _
    $region9: #{feed_forward_nn.1} parent=1 // pred_fallthru
      _
    // Predicated region
    $region10: #{feed_forward_nn.1} parent=1 // pred_check
      _
    $region11: #{feed_forward_nn.1} parent=1 // pred_check_branch
      %25 = sbr.rel (0) target = $region13
    $region12: #{feed_forward_nn.1} parent=1 // pred_region
      _
    $region13: #{feed_forward_nn.1} parent=1 // pred_fallthru
      _
    // Predicated region
    $region14: #{feed_forward_nn.1} parent=1 // pred_check
      _
    $region15: #{feed_forward_nn.1} parent=1 // pred_check_branch
      %27 = sbr.rel (0) target = $region17
    $region16: #{feed_forward_nn.1} parent=1 // pred_region
      %s29 = ssub.s32 2048, 2048
      %30 = vsyncadd [#allocation4], %s29
      %s31 = sshll.u32 [#allocation3], 4
      %s32 = int_to_ptr.vmem [resolvable:$true] %s31
      %37 = dma.hbm_to_vmem [thread:$0]  %s3, 2048, %s32, [#allocation4], 128, 128, 8
    $region17: #{feed_forward_nn.1} parent=1 // pred_fallthru
      _
    // Predicated region
    $region18: #{feed_forward_nn.1} parent=1 // pred_check
      _
    $region19: #{feed_forward_nn.1} parent=1 // pred_check_branch
      %39 = sbr.rel (0) target = $region21
    $region20: #{feed_forward_nn.1} parent=1 // pred_region
      _
    $region21: #{feed_forward_nn.1} parent=1 // pred_fallthru
      _
    // Predicated region
    $region22: #{feed_forward_nn.1} parent=1 // pred_check
      _
    $region23: #{feed_forward_nn.1} parent=1 // pred_check_branch
      %41 = sbr.rel (0) target = $region25
    $region24: #{feed_forward_nn.1} parent=1 // pred_region
      %s43 = ssub.s32 2048, 2048
      %44 = vsyncadd [#allocation6], %s43
      %s45 = sshll.u32 [#allocation5], 4
      %s46 = int_to_ptr.vmem [resolvable:$true] %s45
      %51 = dma.hbm_to_vmem [thread:$0]  %s5, 2048, %s46, [#allocation6], 128, 128, 8
    $region25: #{feed_forward_nn.1} parent=1 // pred_fallthru
      _
    // Predicated region
    $region26: #{feed_forward_nn.1} parent=1 // pred_check
      _
    $region27: #{feed_forward_nn.1} parent=1 // pred_check_branch
      %53 = sbr.rel (0) target = $region29
    $region28: #{feed_forward_nn.1} parent=1 // pred_region
      _
    $region29: #{feed_forward_nn.1} parent=1 // pred_fallthru
      _
    // Predicated region
    $region30: #{feed_forward_nn.1} parent=1 // pred_check
      _
    $region31: #{feed_forward_nn.1} parent=1 // pred_check_branch
      %55 = sbr.rel (0) target = $region33
    $region32: #{feed_forward_nn.1} parent=1 // pred_region
      %s57 = ssub.s32 2048, 2048
      %58 = vsyncadd [#allocation6], %s57
      %s59 = sshll.u32 [#allocation7], 4
      %s60 = int_to_ptr.vmem [resolvable:$true] %s59
      %65 = dma.hbm_to_vmem [thread:$0]  %s7, 2048, %s60, [#allocation6], 128, 128, 8
    $region33: #{feed_forward_nn.1} parent=1 // pred_fallthru
      _
    // Predicated region
    $region34: #{feed_forward_nn.1} parent=1 // pred_check
      _
    $region35: #{feed_forward_nn.1} parent=1 // pred_check_branch
      %67 = sbr.rel (0) target = $region37
    $region36: #{feed_forward_nn.1} parent=1 // pred_region
      _
    $region37: #{feed_forward_nn.1} parent=1 // pred_fallthru
      _
    // Predicated region
    $region38: #{feed_forward_nn.1} parent=1 // pred_check
      _
    $region39: #{feed_forward_nn.1} parent=1 // pred_check_branch
      %69 = sbr.rel (0) target = $region41
    $region40: #{feed_forward_nn.1} parent=1 // pred_region
      _
    $region41: #{feed_forward_nn.1} parent=1 // pred_fallthru
      _
    // Predicated region
    $region42: #{feed_forward_nn.1} parent=1 // pred_check
      _
    $region43: #{feed_forward_nn.1} parent=1 // pred_check_branch
      %71 = sbr.rel (0) target = $region45
    $region44: #{feed_forward_nn.1} parent=1 // pred_region
      _
    $region45: #{feed_forward_nn.1} parent=1 // pred_fallthru
      _
    // Predicated region
    $region46: #{feed_forward_nn.1} parent=1 // pred_check
      _
    $region47: #{feed_forward_nn.1} parent=1 // pred_check_branch
      %73 = sbr.rel (0) target = $region49
    $region48: #{feed_forward_nn.1} parent=1 // pred_region
      %74 = dma.done [#allocation4], 2048
    $region49: #{feed_forward_nn.1} parent=1 // pred_fallthru
      _
    // Predicated region
    $region50: #{feed_forward_nn.1} parent=1 // pred_check
      _
    $region51: #{feed_forward_nn.1} parent=1 // pred_check_branch
      %76 = sbr.rel (0) target = $region53
    $region52: #{feed_forward_nn.1} parent=1 // pred_region
      %77 = dma.done [#allocation6], 2048
    $region53: #{feed_forward_nn.1} parent=1 // pred_fallthru
      _
    // Predicated region
    $region54: #{feed_forward_nn.1} parent=1 // pred_check
      _
    $region55: #{feed_forward_nn.1} parent=1 // pred_check_branch
      %79 = sbr.rel (0) target = $region57
    $region56: #{feed_forward_nn.1} parent=1 // pred_region
      %80 = dma.done [#allocation6], 2048
    $region57: #{feed_forward_nn.1} parent=1 // pred_fallthru
      _
    %v81 = vld [vmem:[%s0] sm:$0xff]
    %v82 = vld [vmem:[%s1] sm:$0xff]
    %v83 = vld [vmem:[%s1 + $0x8] sm:$0xff]
    %v84 = vld [vmem:[%s2] sm:$0x1]
    %v86 = vlaneseq
    %v87 = vshrl.u32 %v86, 7
    %v88 = vsub.s32 0, %v87
    %v89 = vrot.slane %v84, %v88
    %vm91 = vcmask 130048
    %v93 = vsel %vm91, %v81, 0
    %95 = vmatprep.subr.mxu0 0.0
    %96 = vmatpush1.msra.mxu0 %v82
    %97 = vmatprep.subr.mxu0 0.0
    %98 = vmatpush1.msra.mxu0 %v83
    %99 = vmatprep.subr.mxu0 0.0
    %100 = vmatpush1.msra.mxu0 0.0
    %101 = vmatprep.subr.mxu0 0.0
    %102 = vmatpush1.msra.mxu0 0.0
    %103 = vmatprep.subr.mxu0 0.0
    %104 = vmatpush1.msra.mxu0 0.0
    %105 = vmatprep.subr.mxu0 0.0
    %106 = vmatpush1.msra.mxu0 0.0
    %107 = vmatprep.subr.mxu0 0.0
    %108 = vmatpush1.msra.mxu0 0.0
    %109 = vmatprep.subr.mxu0 0.0
    %110 = vmatpush1.msra.mxu0 0.0
    %111 = vmatprep.subr.mxu0 0.0
    %112 = vmatpush1.msra.mxu0 0.0
    %113 = vmatprep.subr.mxu0 0.0
    %114 = vmatpush1.msra.mxu0 0.0
    %115 = vmatprep.subr.mxu0 0.0
    %116 = vmatpush1.msra.mxu0 0.0
    %117 = vmatprep.subr.mxu0 0.0
    %118 = vmatpush1.msra.mxu0 0.0
    %119 = vmatprep.subr.mxu0 0.0
    %120 = vmatpush1.msra.mxu0 0.0
    %121 = vmatprep.subr.mxu0 0.0
    %122 = vmatpush1.msra.mxu0 0.0
    %123 = vmatprep.subr.mxu0 0.0
    %124 = vmatpush1.msra.mxu0 0.0
    %125 = vmatprep.subr.mxu0 0.0
    %126 = vmatpush1.msra.mxu0 0.0
    %127 = vmatprep.subr.mxu0 0.0
    %128 = vmatpush1.msra.mxu0 0.0
    %129 = vmatprep.subr.mxu0 0.0
    %130 = vmatpush1.msra.mxu0 0.0
    %131 = vmatprep.subr.mxu0 0.0
    %132 = vmatpush1.msra.mxu0 0.0
    %133 = vmatprep.subr.mxu0 0.0
    %134 = vmatpush1.msra.mxu0 0.0
    %135 = vmatprep.subr.mxu0 0.0
    %136 = vmatpush1.msra.mxu0 0.0
    %137 = vmatprep.subr.mxu0 0.0
    %138 = vmatpush1.msra.mxu0 0.0
    %139 = vmatprep.subr.mxu0 0.0
    %140 = vmatpush1.msra.mxu0 0.0
    %141 = vmatprep.subr.mxu0 0.0
    %142 = vmatpush1.msra.mxu0 0.0
    %143 = vmatprep.subr.mxu0 0.0
    %144 = vmatpush1.msra.mxu0 0.0
    %145 = vmatprep.subr.mxu0 0.0
    %146 = vmatpush1.msra.mxu0 0.0
    %147 = vmatprep.subr.mxu0 0.0
    %148 = vmatpush1.msra.mxu0 0.0
    %149 = vmatprep.subr.mxu0 0.0
    %150 = vmatpush1.msra.mxu0 0.0
    %151 = vmatprep.subr.mxu0 0.0
    %152 = vmatpush1.msra.mxu0 0.0
    %153 = vmatprep.subr.mxu0 0.0
    %154 = vmatpush1.msra.mxu0 0.0
    %155 = vmatprep.subr.mxu0 0.0
    %156 = vmatpush1.msra.mxu0 0.0
    %157 = vmatprep.subr.mxu0 0.0
    %158 = vmatpush1.msra.mxu0 0.0
    %159 = vmatprep.mubr.f32.mxu0 0.0
    %160 = vmatmul.mubr.f32.gmra.mrb[0].mxu0 %v93
    %v161 = vpop.f32.mrb[0].mxu0
    %v162 = vadd.f32 %v89, %v161
    %v163 = vpop.f32.mrb[0].mxu0
    %164 = vdwg.mxu0
    %v165 = vmax.f32 %v162, 0.0
    %v166 = vld [vmem:[#allocation3] sm:$0xff]
    %v167 = vld [vmem:[#allocation3 + $0x8] sm:$0xff]
    %v168 = vld [vmem:[#allocation3 + $0x10] sm:$0xff]
    %v169 = vld [vmem:[#allocation3 + $0x18] sm:$0xff]
    %v170 = vld [vmem:[#allocation3 + $0x20] sm:$0xff]
    %v171 = vld [vmem:[#allocation3 + $0x28] sm:$0xff]
    %v172 = vld [vmem:[#allocation3 + $0x30] sm:$0xff]
    %v173 = vld [vmem:[#allocation3 + $0x38] sm:$0xff]
    %v174 = vld [vmem:[#allocation3 + $0x40] sm:$0xff]
    %v175 = vld [vmem:[#allocation3 + $0x48] sm:$0xff]
    %v176 = vld [vmem:[#allocation3 + $0x50] sm:$0xff]
    %v177 = vld [vmem:[#allocation3 + $0x58] sm:$0xff]
    %v178 = vld [vmem:[#allocation3 + $0x60] sm:$0xff]
    %v179 = vld [vmem:[#allocation3 + $0x68] sm:$0xff]
    %v180 = vld [vmem:[#allocation3 + $0x70] sm:$0xff]
    %v181 = vld [vmem:[#allocation3 + $0x78] sm:$0xff]
    %v182 = vld [vmem:[%s4] sm:$0x1]
    %v184 = vlaneseq
    %v185 = vshrl.u32 %v184, 7
    %v186 = vsub.s32 0, %v185
    %v187 = vrot.slane %v182, %v186
    %189 = vmatprep.subr.mxu0 0.0
    %190 = vmatpush1.msra.mxu0 %v166
    %191 = vmatprep.subr.mxu0 0.0
    %192 = vmatpush1.msra.mxu0 %v167
    %193 = vmatprep.subr.mxu0 0.0
    %194 = vmatpush1.msra.mxu0 %v168
    %195 = vmatprep.subr.mxu0 0.0
    %196 = vmatpush1.msra.mxu0 %v169
    %197 = vmatprep.subr.mxu0 0.0
    %198 = vmatpush1.msra.mxu0 %v170
    %199 = vmatprep.subr.mxu0 0.0
    %200 = vmatpush1.msra.mxu0 %v171
    %201 = vmatprep.subr.mxu0 0.0
    %202 = vmatpush1.msra.mxu0 %v172
    %203 = vmatprep.subr.mxu0 0.0
    %204 = vmatpush1.msra.mxu0 %v173
    %205 = vmatprep.subr.mxu0 0.0
    %206 = vmatpush1.msra.mxu0 %v174
    %207 = vmatprep.subr.mxu0 0.0
    %208 = vmatpush1.msra.mxu0 %v175
    %209 = vmatprep.subr.mxu0 0.0
    %210 = vmatpush1.msra.mxu0 %v176
    %211 = vmatprep.subr.mxu0 0.0
    %212 = vmatpush1.msra.mxu0 %v177
    %213 = vmatprep.subr.mxu0 0.0
    %214 = vmatpush1.msra.mxu0 %v178
    %215 = vmatprep.subr.mxu0 0.0
    %216 = vmatpush1.msra.mxu0 %v179
    %217 = vmatprep.subr.mxu0 0.0
    %218 = vmatpush1.msra.mxu0 %v180
    %219 = vmatprep.subr.mxu0 0.0
    %220 = vmatpush1.msra.mxu0 %v181
    %221 = vmatprep.subr.mxu0 0.0
    %222 = vmatpush1.msra.mxu0 0.0
    %223 = vmatprep.subr.mxu0 0.0
    %224 = vmatpush1.msra.mxu0 0.0
    %225 = vmatprep.subr.mxu0 0.0
    %226 = vmatpush1.msra.mxu0 0.0
    %227 = vmatprep.subr.mxu0 0.0
    %228 = vmatpush1.msra.mxu0 0.0
    %229 = vmatprep.subr.mxu0 0.0
    %230 = vmatpush1.msra.mxu0 0.0
    %231 = vmatprep.subr.mxu0 0.0
    %232 = vmatpush1.msra.mxu0 0.0
    %233 = vmatprep.subr.mxu0 0.0
    %234 = vmatpush1.msra.mxu0 0.0
    %235 = vmatprep.subr.mxu0 0.0
    %236 = vmatpush1.msra.mxu0 0.0
    %237 = vmatprep.subr.mxu0 0.0
    %238 = vmatpush1.msra.mxu0 0.0
    %239 = vmatprep.subr.mxu0 0.0
    %240 = vmatpush1.msra.mxu0 0.0
    %241 = vmatprep.subr.mxu0 0.0
    %242 = vmatpush1.msra.mxu0 0.0
    %243 = vmatprep.subr.mxu0 0.0
    %244 = vmatpush1.msra.mxu0 0.0
    %245 = vmatprep.subr.mxu0 0.0
    %246 = vmatpush1.msra.mxu0 0.0
    %247 = vmatprep.subr.mxu0 0.0
    %248 = vmatpush1.msra.mxu0 0.0
    %249 = vmatprep.subr.mxu0 0.0
    %250 = vmatpush1.msra.mxu0 0.0
    %251 = vmatprep.subr.mxu0 0.0
    %252 = vmatpush1.msra.mxu0 0.0
    %253 = vmatprep.mubr.f32.mxu0 0.0
    %254 = vmatmul.mubr.f32.gmra.mrb[0].mxu0 %v165
    %v255 = vpop.f32.mrb[0].mxu0
    %v256 = vadd.f32 %v187, %v255
    %v257 = vpop.f32.mrb[0].mxu0
    %258 = vdwg.mxu0
    %v259 = vmax.f32 %v256, 0.0
    %v260 = vld [vmem:[#allocation5] sm:$0xff]
    %v261 = vld [vmem:[#allocation5 + $0x8] sm:$0xff]
    %v262 = vld [vmem:[#allocation5 + $0x10] sm:$0xff]
    %v263 = vld [vmem:[#allocation5 + $0x18] sm:$0xff]
    %v264 = vld [vmem:[#allocation5 + $0x20] sm:$0xff]
    %v265 = vld [vmem:[#allocation5 + $0x28] sm:$0xff]
    %v266 = vld [vmem:[#allocation5 + $0x30] sm:$0xff]
    %v267 = vld [vmem:[#allocation5 + $0x38] sm:$0xff]
    %v268 = vld [vmem:[#allocation5 + $0x40] sm:$0xff]
    %v269 = vld [vmem:[#allocation5 + $0x48] sm:$0xff]
    %v270 = vld [vmem:[#allocation5 + $0x50] sm:$0xff]
    %v271 = vld [vmem:[#allocation5 + $0x58] sm:$0xff]
    %v272 = vld [vmem:[#allocation5 + $0x60] sm:$0xff]
    %v273 = vld [vmem:[#allocation5 + $0x68] sm:$0xff]
    %v274 = vld [vmem:[#allocation5 + $0x70] sm:$0xff]
    %v275 = vld [vmem:[#allocation5 + $0x78] sm:$0xff]
    %v276 = vld [vmem:[%s6] sm:$0x1]
    %v278 = vlaneseq
    %v279 = vshrl.u32 %v278, 7
    %v280 = vsub.s32 0, %v279
    %v281 = vrot.slane %v276, %v280
    %283 = vmatprep.subr.mxu0 0.0
    %284 = vmatpush1.msra.mxu0 %v260
    %285 = vmatprep.subr.mxu0 0.0
    %286 = vmatpush1.msra.mxu0 %v261
    %287 = vmatprep.subr.mxu0 0.0
    %288 = vmatpush1.msra.mxu0 %v262
    %289 = vmatprep.subr.mxu0 0.0
    %290 = vmatpush1.msra.mxu0 %v263
    %291 = vmatprep.subr.mxu0 0.0
    %292 = vmatpush1.msra.mxu0 %v264
    %293 = vmatprep.subr.mxu0 0.0
    %294 = vmatpush1.msra.mxu0 %v265
    %295 = vmatprep.subr.mxu0 0.0
    %296 = vmatpush1.msra.mxu0 %v266
    %297 = vmatprep.subr.mxu0 0.0
    %298 = vmatpush1.msra.mxu0 %v267
    %299 = vmatprep.subr.mxu0 0.0
    %300 = vmatpush1.msra.mxu0 %v268
    %301 = vmatprep.subr.mxu0 0.0
    %302 = vmatpush1.msra.mxu0 %v269
    %303 = vmatprep.subr.mxu0 0.0
    %304 = vmatpush1.msra.mxu0 %v270
    %305 = vmatprep.subr.mxu0 0.0
    %306 = vmatpush1.msra.mxu0 %v271
    %307 = vmatprep.subr.mxu0 0.0
    %308 = vmatpush1.msra.mxu0 %v272
    %309 = vmatprep.subr.mxu0 0.0
    %310 = vmatpush1.msra.mxu0 %v273
    %311 = vmatprep.subr.mxu0 0.0
    %312 = vmatpush1.msra.mxu0 %v274
    %313 = vmatprep.subr.mxu0 0.0
    %314 = vmatpush1.msra.mxu0 %v275
    %315 = vmatprep.subr.mxu0 0.0
    %316 = vmatpush1.msra.mxu0 0.0
    %317 = vmatprep.subr.mxu0 0.0
    %318 = vmatpush1.msra.mxu0 0.0
    %319 = vmatprep.subr.mxu0 0.0
    %320 = vmatpush1.msra.mxu0 0.0
    %321 = vmatprep.subr.mxu0 0.0
    %322 = vmatpush1.msra.mxu0 0.0
    %323 = vmatprep.subr.mxu0 0.0
    %324 = vmatpush1.msra.mxu0 0.0
    %325 = vmatprep.subr.mxu0 0.0
    %326 = vmatpush1.msra.mxu0 0.0
    %327 = vmatprep.subr.mxu0 0.0
    %328 = vmatpush1.msra.mxu0 0.0
    %329 = vmatprep.subr.mxu0 0.0
    %330 = vmatpush1.msra.mxu0 0.0
    %331 = vmatprep.subr.mxu0 0.0
    %332 = vmatpush1.msra.mxu0 0.0
    %333 = vmatprep.subr.mxu0 0.0
    %334 = vmatpush1.msra.mxu0 0.0
    %335 = vmatprep.subr.mxu0 0.0
    %336 = vmatpush1.msra.mxu0 0.0
    %337 = vmatprep.subr.mxu0 0.0
    %338 = vmatpush1.msra.mxu0 0.0
    %339 = vmatprep.subr.mxu0 0.0
    %340 = vmatpush1.msra.mxu0 0.0
    %341 = vmatprep.subr.mxu0 0.0
    %342 = vmatpush1.msra.mxu0 0.0
    %343 = vmatprep.subr.mxu0 0.0
    %344 = vmatpush1.msra.mxu0 0.0
    %345 = vmatprep.subr.mxu0 0.0
    %346 = vmatpush1.msra.mxu0 0.0
    %347 = vmatprep.mubr.f32.mxu0 0.0
    %348 = vmatmul.mubr.f32.gmra.mrb[0].mxu0 %v259
    %v349 = vpop.f32.mrb[0].mxu0
    %v350 = vadd.f32 %v281, %v349
    %v351 = vpop.f32.mrb[0].mxu0
    %352 = vdwg.mxu0
    %v353 = vmax.f32 %v350, 0.0
    %v354 = vld [vmem:[#allocation7] sm:$0xff]
    %v355 = vld [vmem:[#allocation7 + $0x8] sm:$0xff]
    %v356 = vld [vmem:[#allocation7 + $0x10] sm:$0xff]
    %v357 = vld [vmem:[#allocation7 + $0x18] sm:$0xff]
    %v358 = vld [vmem:[#allocation7 + $0x20] sm:$0xff]
    %v359 = vld [vmem:[#allocation7 + $0x28] sm:$0xff]
    %v360 = vld [vmem:[#allocation7 + $0x30] sm:$0xff]
    %v361 = vld [vmem:[#allocation7 + $0x38] sm:$0xff]
    %v362 = vld [vmem:[#allocation7 + $0x40] sm:$0xff]
    %v363 = vld [vmem:[#allocation7 + $0x48] sm:$0xff]
    %v364 = vld [vmem:[#allocation7 + $0x50] sm:$0xff]
    %v365 = vld [vmem:[#allocation7 + $0x58] sm:$0xff]
    %v366 = vld [vmem:[#allocation7 + $0x60] sm:$0xff]
    %v367 = vld [vmem:[#allocation7 + $0x68] sm:$0xff]
    %v368 = vld [vmem:[#allocation7 + $0x70] sm:$0xff]
    %v369 = vld [vmem:[#allocation7 + $0x78] sm:$0xff]
    %v370 = vld [vmem:[%s8] sm:$0x1]
    %v372 = vlaneseq
    %v373 = vshrl.u32 %v372, 7
    %v374 = vsub.s32 0, %v373
    %v375 = vrot.slane %v370, %v374
    %377 = vmatprep.subr.mxu0 0.0
    %378 = vmatpush1.msra.mxu0 %v354
    %379 = vmatprep.subr.mxu0 0.0
    %380 = vmatpush1.msra.mxu0 %v355
    %381 = vmatprep.subr.mxu0 0.0
    %382 = vmatpush1.msra.mxu0 %v356
    %383 = vmatprep.subr.mxu0 0.0
    %384 = vmatpush1.msra.mxu0 %v357
    %385 = vmatprep.subr.mxu0 0.0
    %386 = vmatpush1.msra.mxu0 %v358
    %387 = vmatprep.subr.mxu0 0.0
    %388 = vmatpush1.msra.mxu0 %v359
    %389 = vmatprep.subr.mxu0 0.0
    %390 = vmatpush1.msra.mxu0 %v360
    %391 = vmatprep.subr.mxu0 0.0
    %392 = vmatpush1.msra.mxu0 %v361
    %393 = vmatprep.subr.mxu0 0.0
    %394 = vmatpush1.msra.mxu0 %v362
    %395 = vmatprep.subr.mxu0 0.0
    %396 = vmatpush1.msra.mxu0 %v363
    %397 = vmatprep.subr.mxu0 0.0
    %398 = vmatpush1.msra.mxu0 %v364
    %399 = vmatprep.subr.mxu0 0.0
    %400 = vmatpush1.msra.mxu0 %v365
    %401 = vmatprep.subr.mxu0 0.0
    %402 = vmatpush1.msra.mxu0 %v366
    %403 = vmatprep.subr.mxu0 0.0
    %404 = vmatpush1.msra.mxu0 %v367
    %405 = vmatprep.subr.mxu0 0.0
    %406 = vmatpush1.msra.mxu0 %v368
    %407 = vmatprep.subr.mxu0 0.0
    %408 = vmatpush1.msra.mxu0 %v369
    %409 = vmatprep.subr.mxu0 0.0
    %410 = vmatpush1.msra.mxu0 0.0
    %411 = vmatprep.subr.mxu0 0.0
    %412 = vmatpush1.msra.mxu0 0.0
    %413 = vmatprep.subr.mxu0 0.0
    %414 = vmatpush1.msra.mxu0 0.0
    %415 = vmatprep.subr.mxu0 0.0
    %416 = vmatpush1.msra.mxu0 0.0
    %417 = vmatprep.subr.mxu0 0.0
    %418 = vmatpush1.msra.mxu0 0.0
    %419 = vmatprep.subr.mxu0 0.0
    %420 = vmatpush1.msra.mxu0 0.0
    %421 = vmatprep.subr.mxu0 0.0
    %422 = vmatpush1.msra.mxu0 0.0
    %423 = vmatprep.subr.mxu0 0.0
    %424 = vmatpush1.msra.mxu0 0.0
    %425 = vmatprep.subr.mxu0 0.0
    %426 = vmatpush1.msra.mxu0 0.0
    %427 = vmatprep.subr.mxu0 0.0
    %428 = vmatpush1.msra.mxu0 0.0
    %429 = vmatprep.subr.mxu0 0.0
    %430 = vmatpush1.msra.mxu0 0.0
    %431 = vmatprep.subr.mxu0 0.0
    %432 = vmatpush1.msra.mxu0 0.0
    %433 = vmatprep.subr.mxu0 0.0
    %434 = vmatpush1.msra.mxu0 0.0
    %435 = vmatprep.subr.mxu0 0.0
    %436 = vmatpush1.msra.mxu0 0.0
    %437 = vmatprep.subr.mxu0 0.0
    %438 = vmatpush1.msra.mxu0 0.0
    %439 = vmatprep.subr.mxu0 0.0
    %440 = vmatpush1.msra.mxu0 0.0
    %441 = vmatprep.mubr.f32.mxu0 0.0
    %442 = vmatmul.mubr.f32.gmra.mrb[0].mxu0 %v353
    %v443 = vpop.f32.mrb[0].mxu0
    %v444 = vadd.f32 %v375, %v443
    %v445 = vpop.f32.mrb[0].mxu0
    %446 = vdwg.mxu0
    %v447 = vmax.f32 %v444, 0.0
    %v448 = vld [vmem:[%s9] sm:$0x1]
    %v450 = vlaneseq
    %v451 = vshrl.u32 %v450, 7
    %v452 = vsub.s32 0, %v451
    %v453 = vrot.slane %v448, %v452
    %v455 = vmul.f32 %v447, %v453
    %456 = vadd.xlane.f32.xlu0 %v455
    %v457 = vpop.xlane.xlu0 %456
    %v458 = vld [vmem:[#allocation2] sm:$0x1]
    %v460 = vlaneseq
    %v461 = vshrl.u32 %v460, 7
    %v462 = vsub.s32 0, %v461
    %v463 = vrot.slane %v458, %v462
    %v465 = vadd.f32 %v457, %v463
    %vm466 = vcmask 7168
    %467 = vst.msk [vmem:[%s11] sm:$0xff] %vm466, %v465
    // Predicated region
    $region58: #{feed_forward_nn.1} parent=1 // pred_check
      _
    $region59: #{feed_forward_nn.1} parent=1 // pred_check_branch
      %469 = sbr.rel (0) target = $region61
    $region60: #{feed_forward_nn.1} parent=1 // pred_region
      _
    $region61: #{feed_forward_nn.1} parent=1 // pred_fallthru
      _
    // Predicated region
    $region62: #{feed_forward_nn.1} parent=1 // pred_check
      _
    $region63: #{feed_forward_nn.1} parent=1 // pred_check_branch
      %471 = sbr.rel (0) target = $region65
    $region64: #{feed_forward_nn.1} parent=1 // pred_region
      _
    $region65: #{feed_forward_nn.1} parent=1 // pred_fallthru
      _
    %472 = vsyncpa [#allocation4], 1
    %473 = vsyncpa [#allocation6], 1

</llo_original>
